<compile_context>
chip_gen: v7x
topology: tpu7x:2x2x1
jax: 0.10.0
libtpu: 0.0.40
codegen_flags: <defaults>
</compile_context>

<pallas_src>
import jax
import jax.numpy as jnp
from jax.experimental import pallas as pl
from jax.experimental.pallas import tpu as pltpu


def _classifier_kernel(x_ref, w1_ref, shift_ref, w2_ref, b2_ref,
                       logit_ref, pred_ref):
    # x_ref: [C, tp] slab -- channels on sublanes, pixels on the 128-lane axis.
    x = x_ref[...]

    # 1x1 conv #1 (BN scale folded into the weight) on the MXU,
    # then per-channel shift + ReLU on the VPU. Accumulate in f32.
    h = jnp.dot(w1_ref[...], x, preferred_element_type=jnp.float32)
    h = jnp.maximum(h + shift_ref[...], 0.0)

    # 1x1 conv #2 with bias -> logits [K, tp] (lane-dense). Keep the MXU in
    # the input dtype (bf16 if the producer feeds bf16), accumulate in f32.
    logits = jnp.dot(w2_ref[...], h.astype(w2_ref.dtype),
                     preferred_element_type=jnp.float32)
    logits = logits + b2_ref[...]

    logit_ref[...] = logits.astype(logit_ref.dtype)

    # argmax over the class (sublane) axis with first-max tie-breaking,
    # on the f32 accumulator (independent of logit output dtype).
    k = logits.shape[0]
    max_val = jnp.max(logits, axis=0, keepdims=True)
    class_ids = jax.lax.broadcasted_iota(jnp.int32, logits.shape, 0)
    pred = jnp.min(jnp.where(logits == max_val, class_ids, k),
                   axis=0, keepdims=True)
    pred_ref[...] = pred.astype(jnp.int32)                     # [1, tp]


def _round_up(v, m):
    return (v + m - 1) // m * m


def _largest_divisor_leq(n, cap):
    cap = max(1, min(cap, n))
    for d in range(cap, 0, -1):
        if n % d == 0:
            return d
    return 1


def softmax_classifier_forward(x_nchw, conv1_w, bn_gamma, bn_beta, bn_mean,
                               bn_var, conv2_w, conv2_b, *, eps=1e-5,
                               tp=8192, logit_dtype=None):
    """Forward of SoftmaxClassifier with targets=None.

    Args:
      x_nchw : [N, C, H, W] embedding (f32 or bf16 — fed through unchanged).
      conv1_w: [C, C]  torch Conv2d weight ([C_out, C_in], 1x1 squeezed).
      bn_*   : [C]     BatchNorm2d eval-mode gamma / beta / running stats.
      conv2_w: [K, C]  torch Conv2d weight ([K, C_in], 1x1 squeezed).
      conv2_b: [K]     conv2 bias.
      tp     : requested pixel-tile width in lanes (rounded/clamped inside).
      logit_dtype: output dtype for logits (defaults to x dtype).

    Returns:
      (semantic_prediction [N, H, W] int32, semantic_logit [N, K, H, W])
    """
    N, C, H, W = x_nchw.shape
    K = conv2_w.shape[0]
    HW = H * W
    in_dtype = x_nchw.dtype
    logit_dtype = in_dtype if logit_dtype is None else logit_dtype

    # Fold eval-mode BatchNorm into conv1:  y = (scale*W1) @ x + shift.
    scale = bn_gamma.astype(jnp.float32) / jnp.sqrt(
        bn_var.astype(jnp.float32) + eps)                          # [C]
    w1_folded = (scale[:, None] * conv1_w.astype(jnp.float32)).astype(in_dtype)
    shift = (bn_beta.astype(jnp.float32)
             - bn_mean.astype(jnp.float32) * scale)[:, None]       # [C, 1] f32
    w2 = conv2_w.astype(in_dtype)                                  # [K, C]
    b2_col = conv2_b.astype(jnp.float32)[:, None]                  # [K, 1] f32

    # Pixel-axis tiling: pad only to 128-lane alignment (no-op for aligned
    # H*W) and pick tp_eff as a divisor of the padded length so the grid
    # covers it exactly — no tile-sized over-pad, no tile-sized final slice.
    LANES = 128
    hw_pad = _round_up(HW, LANES)
    num_blocks = hw_pad // LANES
    target_blocks = max(1, min(tp // LANES, num_blocks))
    if N == 1 and num_blocks >= 2:
        # Keep >= 2 pixel tiles so both v7x TensorCores get work.
        target_blocks = max(1, min(target_blocks, num_blocks // 2))
    tile_blocks = _largest_divisor_leq(num_blocks, target_blocks)
    tp_eff = tile_blocks * LANES

    x_flat = x_nchw.reshape(N, C, HW)        # free reshape, pixels-on-lanes
    if hw_pad != HW:
        # <=127-pixel alignment pad only (unavoidable for non-128-aligned HW).
        x_flat = jnp.pad(x_flat, ((0, 0), (0, 0), (0, hw_pad - HW)))

    grid = (N, hw_pad // tp_eff)
    logits_flat, pred_flat = pl.pallas_call(
        _classifier_kernel,
        out_shape=(
            jax.ShapeDtypeStruct((N, K, hw_pad), logit_dtype),
            jax.ShapeDtypeStruct((N, 1, hw_pad), jnp.int32),
        ),
        grid_spec=pltpu.PrefetchScalarGridSpec(
            num_scalar_prefetch=0,
            grid=grid,
            in_specs=[
                pl.BlockSpec((pl.Squeezed(), C, tp_eff),
                             lambda n, p: (n, 0, p)),            # x slab
                pl.BlockSpec((C, C), lambda n, p: (0, 0)),       # folded conv1
                pl.BlockSpec((C, 1), lambda n, p: (0, 0)),       # BN shift
                pl.BlockSpec((K, C), lambda n, p: (0, 0)),       # conv2 weight
                pl.BlockSpec((K, 1), lambda n, p: (0, 0)),       # conv2 bias
            ],
            out_specs=[
                pl.BlockSpec((pl.Squeezed(), K, tp_eff),
                             lambda n, p: (n, 0, p)),            # logits
                pl.BlockSpec((pl.Squeezed(), 1, tp_eff),
                             lambda n, p: (n, 0, p)),            # predictions
            ],
        ),
        compiler_params=pltpu.CompilerParams(
            dimension_semantics=("parallel", "parallel"),
            vmem_limit_bytes=32 * 1024 * 1024),
    )(x_flat, w1_folded, shift, w2, b2_col)

    if hw_pad != HW:
        logits_flat = logits_flat[:, :, :HW]
        pred_flat = pred_flat[:, :, :HW]
    semantic_logit = logits_flat.reshape(N, K, H, W)
    semantic_prediction = pred_flat.reshape(N, H, W)
    return semantic_prediction, semantic_logit


def _reference_logits(x, conv1_w, gamma, beta, mean, var, conv2_w, conv2_b,
                      eps):
    """Pure-JAX reference of the same math (eval-mode BatchNorm)."""
    N, C, H, W = x.shape
    K = conv2_w.shape[0]
    scale = gamma / jnp.sqrt(var + eps)
    shift = beta - mean * scale
    xr = jnp.transpose(x, (0, 2, 3, 1)).reshape(-1, C)            # [P, C]
    h = jnp.maximum(xr @ conv1_w.T * scale + shift, 0.0)
    lg = h @ conv2_w.T + conv2_b
    return jnp.transpose(lg.reshape(N, H, W, K), (0, 3, 1, 2))


if __name__ == "__main__":
    # Small deterministic config: embedding_dim=32, num_classes=16.
    C, K = 32, 16
    eps = 1e-5

    key = jax.random.PRNGKey(0)
    kx, kw1, kg, kb, km, kv, kw2, kb2, kx2 = jax.random.split(key, 9)

    # Conv2d(C, C, 1, bias=False): torch weight [C_out, C_in, 1, 1] squeezed.
    conv1_w = jax.random.normal(kw1, (C, C), dtype=jnp.float32) * 0.1
    # BatchNorm2d(C) eval-mode parameters.
    gamma = 1.0 + 0.1 * jax.random.normal(kg, (C,), dtype=jnp.float32)
    beta = 0.1 * jax.random.normal(kb, (C,), dtype=jnp.float32)
    running_mean = 0.1 * jax.random.normal(km, (C,), dtype=jnp.float32)
    running_var = 1.0 + 0.1 * jax.random.uniform(kv, (C,), dtype=jnp.float32)
    # Conv2d(C, K, 1, bias=True): torch weight [K, C, 1, 1] squeezed, bias [K].
    conv2_w = jax.random.normal(kw2, (K, C), dtype=jnp.float32) * 0.1
    conv2_b = 0.1 * jax.random.normal(kb2, (K,), dtype=jnp.float32)

    # Case 1: 128-aligned H*W (no pad, no slice), N=2.
    N, H, W = 2, 16, 16
    x = jax.random.normal(kx, (N, C, H, W), dtype=jnp.float32)
    pred, logits = softmax_classifier_forward(
        x, conv1_w, gamma, beta, running_mean, running_var, conv2_w, conv2_b,
        eps=eps)
    jax.block_until_ready((pred, logits))

    logits_ref = _reference_logits(x, conv1_w, gamma, beta, running_mean,
                                   running_var, conv2_w, conv2_b, eps)
    assert jnp.allclose(logits, logits_ref, atol=1e-3, rtol=1e-3), (
        float(jnp.max(jnp.abs(logits - logits_ref))))
    assert jnp.array_equal(pred, jnp.argmax(logits, axis=1))
    assert pred.shape == (N, H, W) and logits.shape == (N, K, H, W)

    # Case 2: awkward H*W (needs 128-alignment pad + trim) and N=1
    # (exercises the >=2 pixel-tile clamp for the 2-TensorCore case).
    N2, H2, W2 = 1, 13, 11
    x2 = jax.random.normal(kx2, (N2, C, H2, W2), dtype=jnp.float32)
    pred2, logits2 = softmax_classifier_forward(
        x2, conv1_w, gamma, beta, running_mean, running_var, conv2_w, conv2_b,
        eps=eps)
    jax.block_until_ready((pred2, logits2))

    logits2_ref = _reference_logits(x2, conv1_w, gamma, beta, running_mean,
                                    running_var, conv2_w, conv2_b, eps)
    assert jnp.allclose(logits2, logits2_ref, atol=1e-3, rtol=1e-3), (
        float(jnp.max(jnp.abs(logits2 - logits2_ref))))
    assert jnp.array_equal(pred2, jnp.argmax(logits2, axis=1))
    assert pred2.shape == (N2, H2, W2) and logits2.shape == (N2, K, H2, W2)

    print("KERNEL_OK")
</pallas_src>

<mosaic_0001>
module attributes {stable_mosaic.version = 11 : i64} {
  func.func @_classifier_kernel(%arg0: i32, %arg1: i32, %arg2: memref<1x32x256xf32, #tpu.memory_space<vmem>>, %arg3: memref<32x32xf32, #tpu.memory_space<vmem>>, %arg4: memref<32x1xf32, #tpu.memory_space<vmem>>, %arg5: memref<16x32xf32, #tpu.memory_space<vmem>>, %arg6: memref<16x1xf32, #tpu.memory_space<vmem>>, %arg7: memref<1x16x256xf32, #tpu.memory_space<vmem>>, %arg8: memref<1x1x256xi32, #tpu.memory_space<vmem>>) attributes {dimension_semantics = [#tpu.dimension_semantics<parallel>, #tpu.dimension_semantics<parallel>], iteration_bounds = array<i64: 2, 1>, scalar_prefetch = 0 : i64, scratch_operands = 0 : i64, tpu.core_type = #tpu.core_type<tc>, window_params = [{transform_indices = @transform_0, window_bounds = array<i64: 1, 32, 256>}, {pipeline_mode = #tpu.pipeline_mode<synchronous>, transform_indices = @transform_1, window_bounds = array<i64: 32, 32>}, {pipeline_mode = #tpu.pipeline_mode<synchronous>, transform_indices = @transform_2, window_bounds = array<i64: 32, 1>}, {pipeline_mode = #tpu.pipeline_mode<synchronous>, transform_indices = @transform_3, window_bounds = array<i64: 16, 32>}, {pipeline_mode = #tpu.pipeline_mode<synchronous>, transform_indices = @transform_4, window_bounds = array<i64: 16, 1>}, {transform_indices = @transform_5, window_bounds = array<i64: 1, 16, 256>}, {transform_indices = @transform_6, window_bounds = array<i64: 1, 1, 256>}]} {
    %c0 = arith.constant 0 : index
    %c0_0 = arith.constant 0 : index
    %c0_1 = arith.constant 0 : index
    %0 = vector.load %arg2[%c0, %c0_0, %c0_1] : memref<1x32x256xf32, #tpu.memory_space<vmem>>, vector<1x32x256xf32>
    %1 = vector.shape_cast %0 : vector<1x32x256xf32> to vector<32x256xf32>
    %c0_2 = arith.constant 0 : index
    %c0_3 = arith.constant 0 : index
    %2 = vector.load %arg3[%c0_2, %c0_3] : memref<32x32xf32, #tpu.memory_space<vmem>>, vector<32x32xf32>
    %cst = arith.constant dense<0.000000e+00> : vector<32x256xf32>
    %3 = tpu.matmul %2, %1, %cst {dimension_numbers = #tpu.dot_dimension_numbers<[1], [0], [0], [1], [0, 0, 1, 1], [], []>} : vector<32x32xf32>, vector<32x256xf32>, vector<32x256xf32> -> vector<32x256xf32>
    %c0_4 = arith.constant 0 : index
    %c0_5 = arith.constant 0 : index
    %4 = vector.load %arg4[%c0_4, %c0_5] : memref<32x1xf32, #tpu.memory_space<vmem>>, vector<32x1xf32>
    %5 = vector.broadcast %4 : vector<32x1xf32> to vector<32x256xf32>
    %6 = arith.addf %3, %5 : vector<32x256xf32>
    %cst_6 = arith.constant 0.000000e+00 : f32
    %7 = vector.broadcast %cst_6 : f32 to vector<32x256xf32>
    %8 = arith.maximumf %6, %7 : vector<32x256xf32>
    %c0_7 = arith.constant 0 : index
    %c0_8 = arith.constant 0 : index
    %9 = vector.load %arg5[%c0_7, %c0_8] : memref<16x32xf32, #tpu.memory_space<vmem>>, vector<16x32xf32>
    %cst_9 = arith.constant dense<0.000000e+00> : vector<16x256xf32>
    %10 = tpu.matmul %9, %8, %cst_9 {dimension_numbers = #tpu.dot_dimension_numbers<[1], [0], [0], [1], [0, 0, 1, 1], [], []>} : vector<16x32xf32>, vector<32x256xf32>, vector<16x256xf32> -> vector<16x256xf32>
    %c0_10 = arith.constant 0 : index
    %c0_11 = arith.constant 0 : index
    %11 = vector.load %arg6[%c0_10, %c0_11] : memref<16x1xf32, #tpu.memory_space<vmem>>, vector<16x1xf32>
    %12 = vector.broadcast %11 : vector<16x1xf32> to vector<16x256xf32>
    %13 = arith.addf %10, %12 : vector<16x256xf32>
    %c0_12 = arith.constant 0 : index
    %c0_13 = arith.constant 0 : index
    %c0_14 = arith.constant 0 : index
    %14 = vector.load %arg7[%c0_12, %c0_13, %c0_14] : memref<1x16x256xf32, #tpu.memory_space<vmem>>, vector<1x16x256xf32>
    %15 = vector.shape_cast %14 : vector<1x16x256xf32> to vector<16x256xf32>
    %16 = vector.shape_cast %13 : vector<16x256xf32> to vector<1x16x256xf32>
    tpu.vector_store %arg7[%c0_12, %c0_13, %c0_14], %16 {strides = array<i32>} : memref<1x16x256xf32, #tpu.memory_space<vmem>>, vector<1x16x256xf32>,
    %cst_15 = arith.constant dense<0xFF800000> : vector<256xf32>
    %17 = vector.multi_reduction <maximumf>, %13, %cst_15 [0] : vector<16x256xf32> to vector<256xf32>
    %18 = vector.shape_cast %17 : vector<256xf32> to vector<1x256xf32>
    %19 = tpu.iota {dimensions = array<i32: 0>} : vector<16x256xi32>
    %20 = vector.broadcast %18 : vector<1x256xf32> to vector<16x256xf32>
    %21 = arith.cmpf oeq, %13, %20 : vector<16x256xf32>
    %c16_i32 = arith.constant 16 : i32
    %22 = vector.broadcast %c16_i32 : i32 to vector<16x256xi32>
    %23 = arith.select %21, %19, %22 : vector<16x256xi1>, vector<16x256xi32>
    %cst_16 = arith.constant dense<2147483647> : vector<256xi32>
    %24 = vector.multi_reduction <minsi>, %23, %cst_16 [0] : vector<16x256xi32> to vector<256xi32>
    %25 = vector.shape_cast %24 : vector<256xi32> to vector<1x256xi32>
    %c0_17 = arith.constant 0 : index
    %c0_18 = arith.constant 0 : index
    %c0_19 = arith.constant 0 : index
    %26 = vector.load %arg8[%c0_17, %c0_18, %c0_19] : memref<1x1x256xi32, #tpu.memory_space<vmem>>, vector<1x1x256xi32>
    %27 = vector.shape_cast %26 : vector<1x1x256xi32> to vector<1x256xi32>
    %28 = vector.shape_cast %25 : vector<1x256xi32> to vector<1x1x256xi32>
    tpu.vector_store %arg8[%c0_17, %c0_18, %c0_19], %28 {strides = array<i32>} : memref<1x1x256xi32, #tpu.memory_space<vmem>>, vector<1x1x256xi32>,
    return
  }
  func.func @transform_0(%arg0: i32, %arg1: i32) -> (i32, i32, i32) {
    %c0_i32 = arith.constant 0 : i32
    %c0_i32_0 = arith.constant 0 : i32
    return %arg0, %c0_i32, %arg1 : i32, i32, i32
  }
  func.func @transform_1(%arg0: i32, %arg1: i32) -> (i32, i32) {
    %c0_i32 = arith.constant 0 : i32
    %c0_i32_0 = arith.constant 0 : i32
    %c0_i32_1 = arith.constant 0 : i32
    return %c0_i32, %c0_i32_0 : i32, i32
  }
  func.func @transform_2(%arg0: i32, %arg1: i32) -> (i32, i32) {
    %c0_i32 = arith.constant 0 : i32
    %c0_i32_0 = arith.constant 0 : i32
    %c0_i32_1 = arith.constant 0 : i32
    return %c0_i32, %c0_i32_0 : i32, i32
  }
  func.func @transform_3(%arg0: i32, %arg1: i32) -> (i32, i32) {
    %c0_i32 = arith.constant 0 : i32
    %c0_i32_0 = arith.constant 0 : i32
    %c0_i32_1 = arith.constant 0 : i32
    return %c0_i32, %c0_i32_0 : i32, i32
  }
  func.func @transform_4(%arg0: i32, %arg1: i32) -> (i32, i32) {
    %c0_i32 = arith.constant 0 : i32
    %c0_i32_0 = arith.constant 0 : i32
    %c0_i32_1 = arith.constant 0 : i32
    return %c0_i32, %c0_i32_0 : i32, i32
  }
  func.func @transform_5(%arg0: i32, %arg1: i32) -> (i32, i32, i32) {
    %c0_i32 = arith.constant 0 : i32
    %c0_i32_0 = arith.constant 0 : i32
    return %arg0, %c0_i32, %arg1 : i32, i32, i32
  }
  func.func @transform_6(%arg0: i32, %arg1: i32) -> (i32, i32, i32) {
    %c0_i32 = arith.constant 0 : i32
    %c0_i32_0 = arith.constant 0 : i32
    return %arg0, %c0_i32, %arg1 : i32, i32, i32
  }
}

</mosaic_0001>

<llo_original>
// kernel: tpu_custom_call.1
$region0: #{tpu_custom_call.1}
  #allocation0 [shape = 'u32[]', space=smem, size = 0x4, offset = 0x4, fixed_abs, tag = 'smem constant byte address 0x4 - core index']
  #allocation1 [shape = 'u32[144,128]{1,0:T(1,128)}', space=vmem, size = 0x12000, scoped, tag = 'internal scratch']
  %s0 = inlined_call_operand.hbm [shape: f32[2,32,256], index: 0, kind: input, shape index: {}]
  %s1 = inlined_call_operand.vmem [shape: f32[32,32], index: 1, kind: input, shape index: {}]
  %s2 = inlined_call_operand.vmem [shape: f32[32,1], index: 2, kind: input, shape index: {}]
  %s3 = inlined_call_operand.vmem [shape: f32[16,32], index: 3, kind: input, shape index: {}]
  %s4 = inlined_call_operand.vmem [shape: f32[16,1], index: 4, kind: input, shape index: {}]
  %s5 = inlined_call_operand.hbm [shape: f32[2,16,256], index: 5, kind: output, shape index: {0}]
  %s6 = inlined_call_operand.hbm [shape: s32[2,1,256], index: 6, kind: output, shape index: {1}]
  %7 = xla_tuple %s5, %s6
  %s8 = sld [smem:[#allocation0]]
  $region65: #{tpu_custom_call.1} parent=0
    _
  %s10 = ssub.s32 1, %s8
  %s11 = scalar_select 0, %s10, %s8
  $region1: #{tpu_custom_call.1} parent=0
    #allocation2 [shape = 'u8[65536]{0}', space=vmem, size = 0x10000, scoped, tag = 'input window, operand 0']
    #allocation3 [shape = 's32[2]{0}', space=sflag, size = 0x8, scoped, tag = 'scoped memory for tpu_custom_call.1']
    #allocation4 [shape = 's32[2]{0}', space=sflag, size = 0x8, scoped, tag = 'scoped memory for tpu_custom_call.1']
    #allocation5 [shape = 'u8[32768]{0}', space=vmem, size = 0x8000, scoped, tag = 'output window, operand 0']
    #allocation6 [shape = 'u8[2048]{0}', space=vmem, size = 0x800, scoped, tag = 'output window, operand 1']
    #allocation7 [shape = 's32[2]{0}', space=sflag, size = 0x8, scoped, tag = 'scoped memory for tpu_custom_call.1']
    %12 = vsyncpa [#allocation3], 0
    %s13 = scalar_lea.sflag [#allocation3], 1
    %14 = vsyncpa %s13, 0
    %15 = vsyncpa [#allocation4], 0
    %s16 = scalar_lea.sflag [#allocation4], 1
    %17 = vsyncpa %s16, 0
    %18 = vsyncpa [#allocation7], 0
    %s19 = scalar_lea.sflag [#allocation7], 1
    %20 = vsyncpa %s19, 0
    loop: start=0, step=1, limit=4
    $region2: #{tpu_custom_call.1} parent=1 // loop_pre_header
      _
    $region3: #{tpu_custom_call.1} parent=1 // loop_header
      %s22 = sphi 0, %s26
      %p23 = scmp.ge.s32.totalorder %s22, 4
      %s29 = sphi 0, %s41
      %s30 = sphi 0, %s37
      %s31 = sphi 0, %s29
      %s32 = sphi 0, %s30
      %s33 = sphi 0, %s31
      %s34 = sphi 0, %s32
      %s46 = sphi 0, %s48
      %s49 = sphi 0, %s46
      %s50 = sphi 0, %s49
      %s66 = sphi 0, %s50
      %s70 = sphi 0, %s70
      %s72 = sphi 0, %s70
      %s73 = sphi 0, %s72
      %s87 = sphi 0, %s73
      %s91 = sphi 0, %s91
      %s93 = sphi 0, %s91
      %s94 = sphi 0, %s93
      %s108 = sphi 0, %s94
      %s112 = sphi 0, %s112
      %s114 = sphi 0, %s112
      %s115 = sphi 0, %s114
      %s129 = sphi 0, %s115
      %s133 = sphi 0, %s133
      %s135 = sphi 0, %s133
      %s136 = sphi 0, %s135
      %s150 = sphi 0, %s136
      %s158 = sphi 0, %s160
      %s161 = sphi 0, %s158
      %s162 = sphi 0, %s161
      %s178 = sphi 0, %s162
      %s186 = sphi 0, %s188
      %s189 = sphi 0, %s186
      %s190 = sphi 0, %s189
      %s206 = sphi 0, %s190
    $region4: #{tpu_custom_call.1} parent=1 // loop_header_branch
      %25 = sbr.rel (%p23) target = $region8
    $region5: #{tpu_custom_call.1} parent=1 // loop_body
      %s27 = ssub.s32 %s22, 1
      %s28 = ssub.s32 %s22, 2
      %s35 = sadd.s32 1, %s30
      %p36 = scmp.ge.s32.totalorder %s35, 1
      %s37 = scalar_select %p36, 0, %s35
      %s38 = sadd.s32 1, %s29
      %s39 = scalar_select %p36, %s38, %s29
      %p40 = scmp.ge.s32.totalorder %s39, 2
      %s41 = scalar_select %p40, 0, %s39
      %s42 = ssub.s32 %s29, %s41
      %s43 = ssub.s32 %s30, %s37
      %s44 = sor.u32 %s42, %s43
      %p45 = scmp.eq.s32.totalorder %s44, 0
      %s47 = sadd.s32 %s46, 1
      %s48 = scalar_select %p45, %s46, %s47
      %p51 = pneg %p45
      %p52 = scmp.eq.s32.totalorder %s22, 1
      %p53 = por %p51, %p52
      %p54 = scmp.ne.s32.totalorder %s46, %s49
      %p55 = scmp.eq.s32.totalorder %s22, 0
      %p56 = por %p54, %p55
      %p57 = scmp.ne.s32.totalorder %s46, %s49
      %p58 = scmp.eq.s32.totalorder %s27, 1
      %p59 = por %p57, %p58
      %p60 = scmp.ne.s32.totalorder %s49, %s50
      %p61 = scmp.eq.s32.totalorder %s27, 0
      %p62 = por %p60, %p61
      %p63 = scmp.ne.s32.totalorder %s49, %s50
      %p64 = scmp.eq.s32.totalorder %s28, 1
      %p65 = por %p63, %p64
      %p67 = scmp.ne.s32.totalorder %s50, %s66
      %p68 = scmp.eq.s32.totalorder %s28, 0
      %p69 = por %p67, %p68
      %s71 = sadd.s32 %s70, 1
      %p74 = scmp.eq.s32.totalorder %s22, 1
      %p75 = scmp.ne.s32.totalorder %s70, %s72
      %p76 = scmp.eq.s32.totalorder %s22, 0
      %p77 = por %p75, %p76
      %p78 = scmp.ne.s32.totalorder %s70, %s72
      %p79 = scmp.eq.s32.totalorder %s27, 1
      %p80 = por %p78, %p79
      %p81 = scmp.ne.s32.totalorder %s72, %s73
      %p82 = scmp.eq.s32.totalorder %s27, 0
      %p83 = por %p81, %p82
      %p84 = scmp.ne.s32.totalorder %s72, %s73
      %p85 = scmp.eq.s32.totalorder %s28, 1
      %p86 = por %p84, %p85
      %p88 = scmp.ne.s32.totalorder %s73, %s87
      %p89 = scmp.eq.s32.totalorder %s28, 0
      %p90 = por %p88, %p89
      %s92 = sadd.s32 %s91, 1
      %p95 = scmp.eq.s32.totalorder %s22, 1
      %p96 = scmp.ne.s32.totalorder %s91, %s93
      %p97 = scmp.eq.s32.totalorder %s22, 0
      %p98 = por %p96, %p97
      %p99 = scmp.ne.s32.totalorder %s91, %s93
      %p100 = scmp.eq.s32.totalorder %s27, 1
      %p101 = por %p99, %p100
      %p102 = scmp.ne.s32.totalorder %s93, %s94
      %p103 = scmp.eq.s32.totalorder %s27, 0
      %p104 = por %p102, %p103
      %p105 = scmp.ne.s32.totalorder %s93, %s94
      %p106 = scmp.eq.s32.totalorder %s28, 1
      %p107 = por %p105, %p106
      %p109 = scmp.ne.s32.totalorder %s94, %s108
      %p110 = scmp.eq.s32.totalorder %s28, 0
      %p111 = por %p109, %p110
      %s113 = sadd.s32 %s112, 1
      %p116 = scmp.eq.s32.totalorder %s22, 1
      %p117 = scmp.ne.s32.totalorder %s112, %s114
      %p118 = scmp.eq.s32.totalorder %s22, 0
      %p119 = por %p117, %p118
      %p120 = scmp.ne.s32.totalorder %s112, %s114
      %p121 = scmp.eq.s32.totalorder %s27, 1
      %p122 = por %p120, %p121
      %p123 = scmp.ne.s32.totalorder %s114, %s115
      %p124 = scmp.eq.s32.totalorder %s27, 0
      %p125 = por %p123, %p124
      %p126 = scmp.ne.s32.totalorder %s114, %s115
      %p127 = scmp.eq.s32.totalorder %s28, 1
      %p128 = por %p126, %p127
      %p130 = scmp.ne.s32.totalorder %s115, %s129
      %p131 = scmp.eq.s32.totalorder %s28, 0
      %p132 = por %p130, %p131
      %s134 = sadd.s32 %s133, 1
      %p137 = scmp.eq.s32.totalorder %s22, 1
      %p138 = scmp.ne.s32.totalorder %s133, %s135
      %p139 = scmp.eq.s32.totalorder %s22, 0
      %p140 = por %p138, %p139
      %p141 = scmp.ne.s32.totalorder %s133, %s135
      %p142 = scmp.eq.s32.totalorder %s27, 1
      %p143 = por %p141, %p142
      %p144 = scmp.ne.s32.totalorder %s135, %s136
      %p145 = scmp.eq.s32.totalorder %s27, 0
      %p146 = por %p144, %p145
      %p147 = scmp.ne.s32.totalorder %s135, %s136
      %p148 = scmp.eq.s32.totalorder %s28, 1
      %p149 = por %p147, %p148
      %p151 = scmp.ne.s32.totalorder %s136, %s150
      %p152 = scmp.eq.s32.totalorder %s28, 0
      %p153 = por %p151, %p152
      %s154 = ssub.s32 %s29, %s41
      %s155 = ssub.s32 %s30, %s37
      %s156 = sor.u32 %s154, %s155
      %p157 = scmp.eq.s32.totalorder %s156, 0
      %s159 = sadd.s32 %s158, 1
      %s160 = scalar_select %p157, %s158, %s159
      %p163 = pneg %p157
      %p164 = scmp.eq.s32.totalorder %s22, 1
      %p165 = por %p163, %p164
      %p166 = scmp.ne.s32.totalorder %s158, %s161
      %p167 = scmp.eq.s32.totalorder %s22, 0
      %p168 = por %p166, %p167
      %p169 = scmp.ne.s32.totalorder %s158, %s161
      %p170 = scmp.eq.s32.totalorder %s27, 1
      %p171 = por %p169, %p170
      %p172 = scmp.ne.s32.totalorder %s161, %s162
      %p173 = scmp.eq.s32.totalorder %s27, 0
      %p174 = por %p172, %p173
      %p175 = scmp.ne.s32.totalorder %s161, %s162
      %p176 = scmp.eq.s32.totalorder %s28, 1
      %p177 = por %p175, %p176
      %p179 = scmp.ne.s32.totalorder %s162, %s178
      %p180 = scmp.eq.s32.totalorder %s28, 0
      %p181 = por %p179, %p180
      %s182 = ssub.s32 %s29, %s41
      %s183 = ssub.s32 %s30, %s37
      %s184 = sor.u32 %s182, %s183
      %p185 = scmp.eq.s32.totalorder %s184, 0
      %s187 = sadd.s32 %s186, 1
      %s188 = scalar_select %p185, %s186, %s187
      %p191 = pneg %p185
      %p192 = scmp.eq.s32.totalorder %s22, 1
      %p193 = por %p191, %p192
      %p194 = scmp.ne.s32.totalorder %s186, %s189
      %p195 = scmp.eq.s32.totalorder %s22, 0
      %p196 = por %p194, %p195
      %p197 = scmp.ne.s32.totalorder %s186, %s189
      %p198 = scmp.eq.s32.totalorder %s27, 1
      %p199 = por %p197, %p198
      %p200 = scmp.ne.s32.totalorder %s189, %s190
      %p201 = scmp.eq.s32.totalorder %s27, 0
      %p202 = por %p200, %p201
      %p203 = scmp.ne.s32.totalorder %s189, %s190
      %p204 = scmp.eq.s32.totalorder %s28, 1
      %p205 = por %p203, %p204
      %p207 = scmp.ne.s32.totalorder %s190, %s206
      %p208 = scmp.eq.s32.totalorder %s28, 0
      %p209 = por %p207, %p208
      %p210 = scmp.le.s32.totalorder 1, %s22
      %p211 = scmp.lt.s32.totalorder %s22, 3
      %p212 = pnand %p210, %p211
      %p213 = pneg %p212
      // Predicated region
      $region9: #{tpu_custom_call.1} parent=5 // pred_check
        _
      $region10: #{tpu_custom_call.1} parent=5 // pred_check_branch
        %215 = sbr.rel (%p212) target = $region12
      $region11: #{tpu_custom_call.1} parent=5 // pred_region
        %s216 = ssub.s32 %s22, 1
        // Predicated region
        $region13: #{tpu_custom_call.1} parent=11 // pred_check
          %p217 = pneg %p83
        $region14: #{tpu_custom_call.1} parent=11 // pred_check_branch
          %219 = sbr.rel (%p217) target = $region16
        $region15: #{tpu_custom_call.1} parent=11 // pred_region
          _
        $region16: #{tpu_custom_call.1} parent=11 // pred_fallthru
          _
        // Predicated region
        $region17: #{tpu_custom_call.1} parent=11 // pred_check
          %p220 = pneg %p104
        $region18: #{tpu_custom_call.1} parent=11 // pred_check_branch
          %222 = sbr.rel (%p220) target = $region20
        $region19: #{tpu_custom_call.1} parent=11 // pred_region
          _
        $region20: #{tpu_custom_call.1} parent=11 // pred_fallthru
          _
        // Predicated region
        $region21: #{tpu_custom_call.1} parent=11 // pred_check
          %p223 = pneg %p125
        $region22: #{tpu_custom_call.1} parent=11 // pred_check_branch
          %225 = sbr.rel (%p223) target = $region24
        $region23: #{tpu_custom_call.1} parent=11 // pred_region
          _
        $region24: #{tpu_custom_call.1} parent=11 // pred_fallthru
          _
        // Predicated region
        $region25: #{tpu_custom_call.1} parent=11 // pred_check
          %p226 = pneg %p146
        $region26: #{tpu_custom_call.1} parent=11 // pred_check_branch
          %228 = sbr.rel (%p226) target = $region28
        $region27: #{tpu_custom_call.1} parent=11 // pred_region
          _
        $region28: #{tpu_custom_call.1} parent=11 // pred_fallthru
          _
      $region12: #{tpu_custom_call.1} parent=5 // pred_fallthru
        _
      %p229 = scmp.lt.s32.totalorder %s22, 2
      // Predicated region
      $region29: #{tpu_custom_call.1} parent=5 // pred_check
        %p230 = pneg %p229
      $region30: #{tpu_custom_call.1} parent=5 // pred_check_branch
        %232 = sbr.rel (%p230) target = $region32
      $region31: #{tpu_custom_call.1} parent=5 // pred_region
        // Predicated region
        $region33: #{tpu_custom_call.1} parent=31 // pred_check
          %p233 = pneg %p56
        $region34: #{tpu_custom_call.1} parent=31 // pred_check_branch
          %235 = sbr.rel (%p233) target = $region36
        $region35: #{tpu_custom_call.1} parent=31 // pred_region
          %s236 = sand.u32 %s46, 1
          %s237 = scalar_lea.sflag [#allocation3], %s236
          %s238 = sand.u32 %s46, 1
          %s239 = smul.addr %s238, 64
          %s240 = scalar_lea.vmem [#allocation2], %s239
          %s241 = smul.u32 2, %s30
          %s243 = ssub.s32 1024, 1024
          %244 = vsyncadd %s237, %s243
          %s245 = smul.addr %s29, 8
          %s246 = sadd.s32 %s241, %s245
          %s247 = smul.addr %s246, 128
          %s248 = scalar_lea.hbm %s0, %s247
          %s249 = sshll.u32 %s240, 4
          %s250 = int_to_ptr.vmem [resolvable:$true] %s249
          %255 = dma.hbm_to_vmem [thread:$0]  %s248, 1024, %s250, %s237, 256, 256, 16
        $region36: #{tpu_custom_call.1} parent=31 // pred_fallthru
          _
      $region32: #{tpu_custom_call.1} parent=5 // pred_fallthru
        _
      %p256 = scmp.le.s32.totalorder 1, %s22
      %p257 = scmp.lt.s32.totalorder %s22, 3
      %p258 = pnand %p256, %p257
      %p259 = pneg %p258
      // Predicated region
      $region37: #{tpu_custom_call.1} parent=5 // pred_check
        _
      $region38: #{tpu_custom_call.1} parent=5 // pred_check_branch
        %261 = sbr.rel (%p258) target = $region40
      $region39: #{tpu_custom_call.1} parent=5 // pred_region
        %s262 = ssub.s32 %s22, 1
        %s263 = sand.u32 %s49, 1
        %s264 = scalar_lea.sflag [#allocation3], %s263
        %s265 = sand.u32 %s49, 1
        %s266 = smul.addr %s265, 64
        %s267 = scalar_lea.vmem [#allocation2], %s266
        // Predicated region
        $region41: #{tpu_custom_call.1} parent=39 // pred_check
          %p268 = pneg %p62
        $region42: #{tpu_custom_call.1} parent=39 // pred_check_branch
          %270 = sbr.rel (%p268) target = $region44
        $region43: #{tpu_custom_call.1} parent=39 // pred_region
          %271 = dma.done %s264, 1024
        $region44: #{tpu_custom_call.1} parent=39 // pred_fallthru
          _
        %s272 = sand.u32 %s49, 1
        %s273 = scalar_lea.sflag [#allocation3], %s272
        %s274 = sand.u32 %s49, 1
        %s275 = smul.addr %s274, 64
        %s276 = scalar_lea.vmem [#allocation2], %s275
        %p277 = pneg %p62
        %p278 = pneg %p59
        %p279 = pneg %p83
        %p280 = pneg %p80
        %p281 = pneg %p104
        %p282 = pneg %p101
        %p283 = pneg %p125
        %p284 = pneg %p122
        %p285 = pneg %p146
        %p286 = pneg %p143
        %p287 = pneg %p174
        %p288 = pneg %p171
        %s289 = sand.u32 %s161, 1
        %s290 = scalar_lea.sflag [#allocation4], %s289
        %s291 = sand.u32 %s161, 1
        %s292 = smul.addr %s291, 32
        %s293 = scalar_lea.vmem [#allocation5], %s292
        %p294 = pneg %p202
        %p295 = pneg %p199
        %s296 = sand.u32 %s189, 1
        %s297 = scalar_lea.sflag [#allocation7], %s296
        %s298 = sand.u32 %s189, 1
        %s299 = smul.addr %s298, 2
        %s300 = scalar_lea.vmem [#allocation6], %s299
        %s301 = smul.u32 2, %s32
        %s302 = smul.u32 2, %s32
        %s303 = smul.u32 2, %s32
        %v304 = vld [vmem:[%s267] sm:$0xff]
        %v305 = vld [vmem:[%s267 + $0x8] sm:$0xff]
        %v306 = vld [vmem:[%s267 + $0x10] sm:$0xff]
        %v307 = vld [vmem:[%s267 + $0x18] sm:$0xff]
        %v308 = vld [vmem:[%s267 + $0x20] sm:$0xff]
        %v309 = vld [vmem:[%s267 + $0x28] sm:$0xff]
        %v310 = vld [vmem:[%s267 + $0x30] sm:$0xff]
        %v311 = vld [vmem:[%s267 + $0x38] sm:$0xff]
        %v312 = vld [vmem:[%s1] sm:$0xff]
        %v313 = vld [vmem:[%s1 + $0x8] sm:$0xff]
        %v314 = vld [vmem:[%s1 + $0x10] sm:$0xff]
        %v315 = vld [vmem:[%s1 + $0x18] sm:$0xff]
        %v316 = vld [vmem:[%s2] sm:$0xff]
        %v317 = vld [vmem:[%s2 + $0x8] sm:$0xff]
        %v318 = vld [vmem:[%s2 + $0x10] sm:$0xff]
        %v319 = vld [vmem:[%s2 + $0x18] sm:$0xff]
        %321 = vset.pattern.permute.xlu0 0
        %322 = vperm.xlu0 %321, %v316
        %v323 = vpop.permute.xlu0 %322
        %326 = vset.pattern.permute.xlu0 0
        %327 = vperm.xlu0 %326, %v317
        %v328 = vpop.permute.xlu0 %327
        %331 = vset.pattern.permute.xlu0 0
        %332 = vperm.xlu0 %331, %v318
        %v333 = vpop.permute.xlu0 %332
        %336 = vset.pattern.permute.xlu0 0
        %337 = vperm.xlu0 %336, %v319
        %v338 = vpop.permute.xlu0 %337
        %vm340 = vcmask 261120
        %v342 = vsel %vm340, %v312, 0
        %v345 = vsel %vm340, %v313, 0
        %v348 = vsel %vm340, %v314, 0
        %v351 = vsel %vm340, %v315, 0
        %353 = vmatprep.subr.mxu0 %v305
        %354 = vmatpush1.msra.mxu0 %v304
        %355 = vmatprep.subr.mxu0 %v307
        %356 = vmatpush1.msra.mxu0 %v306
        %357 = vmatprep.subr.mxu0 %v309
        %358 = vmatpush1.msra.mxu0 %v308
        %359 = vmatprep.subr.mxu0 %v311
        %360 = vmatpush1.msra.mxu0 %v310
        %361 = vmatprep.subr.mxu0 0.0
        %362 = vmatpush1.msra.mxu0 0.0
        %363 = vmatprep.subr.mxu0 0.0
        %364 = vmatpush1.msra.mxu0 0.0
        %365 = vmatprep.subr.mxu0 0.0
        %366 = vmatpush1.msra.mxu0 0.0
        %367 = vmatprep.subr.mxu0 0.0
        %368 = vmatpush1.msra.mxu0 0.0
        %369 = vmatprep.subr.mxu0 0.0
        %370 = vmatpush1.msra.mxu0 0.0
        %371 = vmatprep.subr.mxu0 0.0
        %372 = vmatpush1.msra.mxu0 0.0
        %373 = vmatprep.subr.mxu0 0.0
        %374 = vmatpush1.msra.mxu0 0.0
        %375 = vmatprep.subr.mxu0 0.0
        %376 = vmatpush1.msra.mxu0 0.0
        %377 = vmatprep.subr.mxu0 0.0
        %378 = vmatpush1.msra.mxu0 0.0
        %379 = vmatprep.subr.mxu0 0.0
        %380 = vmatpush1.msra.mxu0 0.0
        %381 = vmatprep.subr.mxu0 0.0
        %382 = vmatpush1.msra.mxu0 0.0
        %383 = vmatprep.subr.mxu0 0.0
        %384 = vmatpush1.msra.mxu0 0.0
        %385 = vmatprep.subr.mxu0 0.0
        %386 = vmatpush1.msra.mxu0 0.0
        %387 = vmatprep.subr.mxu0 0.0
        %388 = vmatpush1.msra.mxu0 0.0
        %389 = vmatprep.subr.mxu0 0.0
        %390 = vmatpush1.msra.mxu0 0.0
        %391 = vmatprep.subr.mxu0 0.0
        %392 = vmatpush1.msra.mxu0 0.0
        %393 = vmatprep.subr.mxu0 0.0
        %394 = vmatpush1.msra.mxu0 0.0
        %395 = vmatprep.subr.mxu0 0.0
        %396 = vmatpush1.msra.mxu0 0.0
        %397 = vmatprep.subr.mxu0 0.0
        %398 = vmatpush1.msra.mxu0 0.0
        %399 = vmatprep.subr.mxu0 0.0
        %400 = vmatpush1.msra.mxu0 0.0
        %401 = vmatprep.subr.mxu0 0.0
        %402 = vmatpush1.msra.mxu0 0.0
        %403 = vmatprep.subr.mxu0 0.0
        %404 = vmatpush1.msra.mxu0 0.0
        %405 = vmatprep.subr.mxu0 0.0
        %406 = vmatpush1.msra.mxu0 0.0
        %407 = vmatprep.subr.mxu0 0.0
        %408 = vmatpush1.msra.mxu0 0.0
        %409 = vmatprep.subr.mxu0 0.0
        %410 = vmatpush1.msra.mxu0 0.0
        %411 = vmatprep.subr.mxu0 0.0
        %412 = vmatpush1.msra.mxu0 0.0
        %413 = vmatprep.subr.mxu0 0.0
        %414 = vmatpush1.msra.mxu0 0.0
        %415 = vmatprep.subr.mxu0 0.0
        %416 = vmatpush1.msra.mxu0 0.0
        %417 = vmatprep.mubr.f32.mxu0 0.0
        %418 = vmatmul.mubr.f32.gmra.mrb[0].mxu0 %v342
        %v419 = vpop.f32.mrb[0].mxu0
        %v420 = vadd.f32 %v323, %v419
        %v421 = vpop.f32.mrb[0].mxu0
        %v422 = vadd.f32 %v323, %v421
        %423 = vmatprep.mubr.f32.mxu0 0.0
        %424 = vmatmul.mubr.f32.gmra.mrb[0].mxu0 %v345
        %v425 = vpop.f32.mrb[0].mxu0
        %v426 = vadd.f32 %v328, %v425
        %v427 = vpop.f32.mrb[0].mxu0
        %v428 = vadd.f32 %v328, %v427
        %429 = vmatprep.mubr.f32.mxu0 0.0
        %430 = vmatmul.mubr.f32.gmra.mrb[0].mxu0 %v348
        %v431 = vpop.f32.mrb[0].mxu0
        %v432 = vadd.f32 %v333, %v431
        %v433 = vpop.f32.mrb[0].mxu0
        %v434 = vadd.f32 %v333, %v433
        %435 = vmatprep.mubr.f32.mxu0 0.0
        %436 = vmatmul.mubr.f32.gmra.mrb[0].mxu0 %v351
        %v437 = vpop.f32.mrb[0].mxu0
        %v438 = vadd.f32 %v338, %v437
        %v439 = vpop.f32.mrb[0].mxu0
        %v440 = vadd.f32 %v338, %v439
        %441 = vdwg.mxu0
        %v442 = vmax.f32 %v420, 0.0
        %v443 = vmax.f32 %v422, 0.0
        %v444 = vmax.f32 %v426, 0.0
        %v445 = vmax.f32 %v428, 0.0
        %v446 = vmax.f32 %v432, 0.0
        %v447 = vmax.f32 %v434, 0.0
        %v448 = vmax.f32 %v438, 0.0
        %v449 = vmax.f32 %v440, 0.0
        %v450 = vld [vmem:[%s3] sm:$0xff]
        %v451 = vld [vmem:[%s3 + $0x8] sm:$0xff]
        %v452 = vld [vmem:[%s4] sm:$0xff]
        %v453 = vld [vmem:[%s4 + $0x8] sm:$0xff]
        %455 = vset.pattern.permute.xlu0 0
        %456 = vperm.xlu0 %455, %v452
        %v457 = vpop.permute.xlu0 %456
        %460 = vset.pattern.permute.xlu0 0
        %461 = vperm.xlu0 %460, %v453
        %v462 = vpop.permute.xlu0 %461
        %v465 = vsel %vm340, %v450, 0
        %v468 = vsel %vm340, %v451, 0
        %470 = vmatprep.subr.mxu0 %v443
        %471 = vmatpush1.msra.mxu0 %v442
        %472 = vmatprep.subr.mxu0 %v445
        %473 = vmatpush1.msra.mxu0 %v444
        %474 = vmatprep.subr.mxu0 %v447
        %475 = vmatpush1.msra.mxu0 %v446
        %476 = vmatprep.subr.mxu0 %v449
        %477 = vmatpush1.msra.mxu0 %v448
        %478 = vmatprep.subr.mxu0 0.0
        %479 = vmatpush1.msra.mxu0 0.0
        %480 = vmatprep.subr.mxu0 0.0
        %481 = vmatpush1.msra.mxu0 0.0
        %482 = vmatprep.subr.mxu0 0.0
        %483 = vmatpush1.msra.mxu0 0.0
        %484 = vmatprep.subr.mxu0 0.0
        %485 = vmatpush1.msra.mxu0 0.0
        %486 = vmatprep.subr.mxu0 0.0
        %487 = vmatpush1.msra.mxu0 0.0
        %488 = vmatprep.subr.mxu0 0.0
        %489 = vmatpush1.msra.mxu0 0.0
        %490 = vmatprep.subr.mxu0 0.0
        %491 = vmatpush1.msra.mxu0 0.0
        %492 = vmatprep.subr.mxu0 0.0
        %493 = vmatpush1.msra.mxu0 0.0
        %494 = vmatprep.subr.mxu0 0.0
        %495 = vmatpush1.msra.mxu0 0.0
        %496 = vmatprep.subr.mxu0 0.0
        %497 = vmatpush1.msra.mxu0 0.0
        %498 = vmatprep.subr.mxu0 0.0
        %499 = vmatpush1.msra.mxu0 0.0
        %500 = vmatprep.subr.mxu0 0.0
        %501 = vmatpush1.msra.mxu0 0.0
        %502 = vmatprep.subr.mxu0 0.0
        %503 = vmatpush1.msra.mxu0 0.0
        %504 = vmatprep.subr.mxu0 0.0
        %505 = vmatpush1.msra.mxu0 0.0
        %506 = vmatprep.subr.mxu0 0.0
        %507 = vmatpush1.msra.mxu0 0.0
        %508 = vmatprep.subr.mxu0 0.0
        %509 = vmatpush1.msra.mxu0 0.0
        %510 = vmatprep.subr.mxu0 0.0
        %511 = vmatpush1.msra.mxu0 0.0
        %512 = vmatprep.subr.mxu0 0.0
        %513 = vmatpush1.msra.mxu0 0.0
        %514 = vmatprep.subr.mxu0 0.0
        %515 = vmatpush1.msra.mxu0 0.0
        %516 = vmatprep.subr.mxu0 0.0
        %517 = vmatpush1.msra.mxu0 0.0
        %518 = vmatprep.subr.mxu0 0.0
        %519 = vmatpush1.msra.mxu0 0.0
        %520 = vmatprep.subr.mxu0 0.0
        %521 = vmatpush1.msra.mxu0 0.0
        %522 = vmatprep.subr.mxu0 0.0
        %523 = vmatpush1.msra.mxu0 0.0
        %524 = vmatprep.subr.mxu0 0.0
        %525 = vmatpush1.msra.mxu0 0.0
        %526 = vmatprep.subr.mxu0 0.0
        %527 = vmatpush1.msra.mxu0 0.0
        %528 = vmatprep.subr.mxu0 0.0
        %529 = vmatpush1.msra.mxu0 0.0
        %530 = vmatprep.subr.mxu0 0.0
        %531 = vmatpush1.msra.mxu0 0.0
        %532 = vmatprep.subr.mxu0 0.0
        %533 = vmatpush1.msra.mxu0 0.0
        %534 = vmatprep.mubr.f32.mxu0 0.0
        %535 = vmatmul.mubr.f32.gmra.mrb[0].mxu0 %v465
        %v536 = vpop.f32.mrb[0].mxu0
        %v537 = vadd.f32 %v457, %v536
        %v538 = vpop.f32.mrb[0].mxu0
        %v539 = vadd.f32 %v457, %v538
        %540 = vmatprep.mubr.f32.mxu0 0.0
        %541 = vmatmul.mubr.f32.gmra.mrb[0].mxu0 %v468
        %v542 = vpop.f32.mrb[0].mxu0
        %v543 = vadd.f32 %v462, %v542
        %v544 = vpop.f32.mrb[0].mxu0
        %v545 = vadd.f32 %v462, %v544
        %546 = vdwg.mxu0
        %547 = vst [vmem:[%s293] sm:$0xff] %v537
        %548 = vst [vmem:[%s293 + $0x8] sm:$0xff] %v539
        %549 = vst [vmem:[%s293 + $0x10] sm:$0xff] %v543
        %550 = vst [vmem:[%s293 + $0x18] sm:$0xff] %v545
        %v551 = vmax.f32 %v537, %v543
        %v552 = vrot.slane %v551, 4
        %v553 = vmax.f32 %v551, %v552
        %v554 = vrot.slane %v553, 2
        %v555 = vmax.f32 %v553, %v554
        %v556 = vrot.slane %v555, 1
        %v557 = vmax.f32 %v555, %v556
        %v558 = vmax.f32 %v539, %v545
        %v559 = vrot.slane %v558, 4
        %v560 = vmax.f32 %v558, %v559
        %v561 = vrot.slane %v560, 2
        %v562 = vmax.f32 %v560, %v561
        %v563 = vrot.slane %v562, 1
        %v564 = vmax.f32 %v562, %v563
        %v565 = vlaneseq
        %v566 = vshrl.u32 %v565, 7
        %v567 = vadd.s32 %v566, 8
        %vm568 = vcmp.eq.f32.partialorder %v537, %v557
        %vm569 = vcmp.eq.f32.partialorder %v539, %v564
        %vm570 = vcmp.eq.f32.partialorder %v543, %v557
        %vm571 = vcmp.eq.f32.partialorder %v545, %v564
        %v572 = vsel %vm568, %v566, 16
        %v573 = vsel %vm569, %v566, 16
        %v574 = vsel %vm570, %v567, 16
        %v575 = vsel %vm571, %v567, 16
        %vm576 = vcmp.lt.s32.totalorder %v572, %v574
        %v577 = vsel %vm576, %v572, %v574
        %v578 = vrot.slane %v577, 4
        %vm579 = vcmp.lt.s32.totalorder %v577, %v578
        %v580 = vsel %vm579, %v577, %v578
        %v581 = vrot.slane %v580, 2
        %vm582 = vcmp.lt.s32.totalorder %v580, %v581
        %v583 = vsel %vm582, %v580, %v581
        %v584 = vrot.slane %v583, 1
        %vm585 = vcmp.lt.s32.totalorder %v583, %v584
        %v586 = vsel %vm585, %v583, %v584
        %vm587 = vcmp.lt.s32.totalorder %v573, %v575
        %v588 = vsel %vm587, %v573, %v575
        %v589 = vrot.slane %v588, 4
        %vm590 = vcmp.lt.s32.totalorder %v588, %v589
        %v591 = vsel %vm590, %v588, %v589
        %v592 = vrot.slane %v591, 2
        %vm593 = vcmp.lt.s32.totalorder %v591, %v592
        %v594 = vsel %vm593, %v591, %v592
        %v595 = vrot.slane %v594, 1
        %vm596 = vcmp.lt.s32.totalorder %v594, %v595
        %v597 = vsel %vm596, %v594, %v595
        %v598 = vcombine.low %v586, %v597
        %v600 = vunpack.c.l.s4 1966171168
        %v601 = vunpack.c.0.s8 %v600
        %v602 = vlaneseq
        %v603 = vshrl.u32 %v602, 7
        %v604 = vsub.s32 %v601, %v603
        %v605 = vrot.slane %v598, %v604
        %v607 = vunpack.c.l.s4 1966171168
        %v608 = vunpack.c.0.s8 %v607
        %v609 = vlaneseq
        %v610 = vshrl.u32 %v609, 7
        %v611 = vsub.s32 %v608, %v610
        %v612 = vrot.slane %v605, %v611
        %v613 = vlaneseq
        %vm614 = vcmp.ge.s32.totalorder %v613, 0
        %vm615 = vcmp.lt.s32.totalorder %v613, 256
        %vm616 = vmand %vm614, %vm615
        %617 = vst.msk [vmem:[%s300] sm:$0x3] %vm616, %v612
        %s618 = sand.u32 %s161, 1
        %s619 = scalar_lea.sflag [#allocation4], %s618
        %s620 = sand.u32 %s161, 1
        %s621 = smul.addr %s620, 32
        %s622 = scalar_lea.vmem [#allocation5], %s621
        %s623 = sand.u32 %s189, 1
        %s624 = scalar_lea.sflag [#allocation7], %s623
        %s625 = sand.u32 %s189, 1
        %s626 = smul.addr %s625, 2
        %s627 = scalar_lea.vmem [#allocation6], %s626
        // Predicated region
        $region45: #{tpu_custom_call.1} parent=39 // pred_check
          %p628 = pneg %p171
        $region46: #{tpu_custom_call.1} parent=39 // pred_check_branch
          %630 = sbr.rel (%p628) target = $region48
        $region47: #{tpu_custom_call.1} parent=39 // pred_region
          %s631 = smul.u32 2, %s32
          %s633 = ssub.s32 512, 512
          %634 = vsyncadd %s619, %s633
          %s635 = smul.addr %s31, 4
          %s636 = sadd.s32 %s631, %s635
          %s637 = smul.addr %s636, 128
          %s638 = scalar_lea.hbm %s5, %s637
          %s639 = sshll.u32 %s622, 4
          %s640 = int_to_ptr.vmem [resolvable:$true] %s639
          %645 = dma.vmem_to_hbm [thread:$0]  %s640, 512, %s638, %s619, 256, 256, 16
        $region48: #{tpu_custom_call.1} parent=39 // pred_fallthru
          _
        // Predicated region
        $region49: #{tpu_custom_call.1} parent=39 // pred_check
          %p646 = pneg %p199
        $region50: #{tpu_custom_call.1} parent=39 // pred_check_branch
          %648 = sbr.rel (%p646) target = $region52
        $region51: #{tpu_custom_call.1} parent=39 // pred_region
          %s649 = smul.u32 2, %s32
          %s651 = ssub.s32 32, 32
          %652 = vsyncadd %s624, %s651
          %s653 = smul.addr %s31, 2
          %s654 = sadd.s32 %s649, %s653
          %s655 = smul.addr %s654, 16
          %s656 = scalar_lea.hbm %s6, %s655
          %s658 = sshll.u32 %s627, 4
          %s659 = int_to_ptr.vmem [resolvable:$true] %s658
          %661 = dma.vmem_to_hbm [thread:$0]  %s659, 32, %s656, %s624
        $region52: #{tpu_custom_call.1} parent=39 // pred_fallthru
          _
      $region40: #{tpu_custom_call.1} parent=5 // pred_fallthru
        _
      %p662 = scmp.le.s32.totalorder 2, %s22
      // Predicated region
      $region53: #{tpu_custom_call.1} parent=5 // pred_check
        %p663 = pneg %p662
      $region54: #{tpu_custom_call.1} parent=5 // pred_check_branch
        %665 = sbr.rel (%p663) target = $region56
      $region55: #{tpu_custom_call.1} parent=5 // pred_region
        %s666 = ssub.s32 %s22, 2
        // Predicated region
        $region57: #{tpu_custom_call.1} parent=55 // pred_check
          %p667 = pneg %p177
        $region58: #{tpu_custom_call.1} parent=55 // pred_check_branch
          %669 = sbr.rel (%p667) target = $region60
        $region59: #{tpu_custom_call.1} parent=55 // pred_region
          %s670 = sand.u32 %s162, 1
          %s671 = scalar_lea.sflag [#allocation4], %s670
          %s672 = sand.u32 %s162, 1
          %s673 = smul.addr %s672, 32
          %s674 = scalar_lea.vmem [#allocation5], %s673
          %675 = dma.done %s671, 512
        $region60: #{tpu_custom_call.1} parent=55 // pred_fallthru
          _
        // Predicated region
        $region61: #{tpu_custom_call.1} parent=55 // pred_check
          %p676 = pneg %p205
        $region62: #{tpu_custom_call.1} parent=55 // pred_check_branch
          %678 = sbr.rel (%p676) target = $region64
        $region63: #{tpu_custom_call.1} parent=55 // pred_region
          %s679 = sand.u32 %s190, 1
          %s680 = scalar_lea.sflag [#allocation7], %s679
          %s681 = sand.u32 %s190, 1
          %s682 = smul.addr %s681, 2
          %s683 = scalar_lea.vmem [#allocation6], %s682
          %684 = dma.done %s680, 32
        $region64: #{tpu_custom_call.1} parent=55 // pred_fallthru
          _
      $region56: #{tpu_custom_call.1} parent=5 // pred_fallthru
        _
    $region6: #{tpu_custom_call.1} parent=1 // loop_footer
      %s26 = sadd.s32 1, %s22
    $region7: #{tpu_custom_call.1} parent=1 // loop_footer_branch
      %21 = sbr.rel target = $region3
    $region8: #{tpu_custom_call.1} parent=1 // loop_exit
      _
    %685 = vsyncpa [#allocation3], 1
    %s686 = scalar_lea.sflag [#allocation3], 1
    %687 = vsyncpa %s686, 1
    %688 = vsyncpa [#allocation4], 1
    %s689 = scalar_lea.sflag [#allocation4], 1
    %690 = vsyncpa %s689, 1
    %691 = vsyncpa [#allocation7], 1
    %s692 = scalar_lea.sflag [#allocation7], 1
    %693 = vsyncpa %s692, 1

</llo_original>
